<compile_context>
chip_gen: v7x
topology: tpu7x:2x2x1
jax: 0.10.0
libtpu: 0.0.40
codegen_flags: <defaults>
</compile_context>

<pallas_src>
import math

import jax
import jax.numpy as jnp
from jax import lax
from jax.experimental import pallas as pl
from jax.experimental.pallas import tpu as pltpu

_SQRT_HALF = 1.0 / math.sqrt(2.0)


def _round_up(x, m):
    return (x + m - 1) // m * m


def _answer_head_kernel(x_ref, w1_ref, lnp_ref, w2_ref, b2_ref, out_ref):
    """One batch tile: Linear1 -> GELU(erf) -> LayerNorm -> Linear2 (+bias)."""
    x = x_ref[...].astype(w1_ref.dtype)
    h = jnp.dot(x, w1_ref[...], preferred_element_type=jnp.float32)
    h = h + lnp_ref[0:1, :]                         # + b1 (f32, sublane broadcast)

    # Exact GELU (torch.nn.GELU default): 0.5*x*(1+erf(x/sqrt(2)))
    g = 0.5 * h * (1.0 + lax.erf(h * _SQRT_HALF))

    # LayerNorm over last dim, eps=1e-12, elementwise affine (f32 throughout).
    mean = jnp.mean(g, axis=-1, keepdims=True)
    c = g - mean
    var = jnp.mean(c * c, axis=-1, keepdims=True)
    ln = c * lax.rsqrt(var + 1e-12) * lnp_ref[1:2, :] + lnp_ref[2:3, :]

    logits = jnp.dot(ln.astype(w2_ref.dtype), w2_ref[...],
                     preferred_element_type=jnp.float32)
    out_ref[...] = (logits + b2_ref[...]).astype(out_ref.dtype)


def prepare_answer_head_params(params, *, compute_dtype=jnp.bfloat16):
    """One-time param prep (hoisted out of the per-call path).

    Casts the big weights to compute_dtype, pads the label dim up to a multiple
    of 128 (lane-dense output stores), and packs b1/gamma/beta into a single
    (3, H2) f32 input so the kernel takes one small DMA instead of three.
    """
    w1, b1, gamma, beta, w2, b2 = (params["w1"], params["b1"], params["gamma"],
                                   params["beta"], params["w2"], params["b2"])
    H2 = w1.shape[1]
    L = w2.shape[1]
    L_pad = _round_up(max(L, 128), 128)

    w1c = w1.astype(compute_dtype)
    w2c = jnp.zeros((H2, L_pad), compute_dtype).at[:, :L].set(w2.astype(compute_dtype))
    b2p = jnp.zeros((1, L_pad), jnp.float32).at[0, :L].set(b2.astype(jnp.float32))
    lnp = jnp.stack([b1, gamma, beta]).astype(jnp.float32)          # (3, H2)
    return dict(w1=w1c, ln_params=lnp, w2=w2c, b2=b2p, num_labels=int(L))


def lxmert_answer_head(pooled_output, prepped, *, tile_b=None,
                       out_dtype=jnp.float32):
    """pooled_output: (B, H) float32; prepped: prepare_answer_head_params(...).

    Returns question_answering_score of shape (B, num_labels)."""
    B, H = pooled_output.shape
    w1, lnp, w2, b2 = prepped["w1"], prepped["ln_params"], prepped["w2"], prepped["b2"]
    L = prepped["num_labels"]
    H2 = w1.shape[1]
    L_pad = w2.shape[1]
    itemsize = jnp.dtype(w1.dtype).itemsize

    # Batch tiling: always a multiple of 8 sublanes; aim for >=2 tiles (megacore)
    # once the batch is big enough, and cap the tile so the per-tile buffers stay
    # comfortably inside v7x's 64 MiB VMEM.
    if tile_b is None:
        if B <= 8:
            tile_b = 8
        elif B <= 512:
            tile_b = _round_up((B + 1) // 2, 8)     # >=2 batch tiles
        else:
            tile_b = 256
    tile_b = _round_up(tile_b, 8)
    B_pad = _round_up(B, tile_b)

    x = pooled_output.astype(jnp.float32)
    if B_pad != B:
        x = jnp.zeros((B_pad, H), jnp.float32).at[:B, :].set(x)

    grid = (B_pad // tile_b,)

    cost = pl.CostEstimate(
        flops=2 * B_pad * (H * H2 + H2 * L_pad),
        transcendentals=0,                          # erf lowers to a VPU polynomial
        bytes_accessed=(B_pad * H * 4
                        + (H * H2 + H2 * L_pad) * itemsize   # weights read once each
                        + (3 * H2 + L_pad) * 4
                        + B_pad * L_pad * jnp.dtype(out_dtype).itemsize),
    )

    def _run(single_buffer):
        # Grid-invariant inputs (constant index_map): single-buffer them so the
        # pipeline does not waste VMEM double-buffering constant blocks.
        def inv_spec(shape):
            if single_buffer:
                return pl.BlockSpec(shape, lambda i: (0, 0),
                                    pipeline_mode=pl.Buffered(1))
            return pl.BlockSpec(shape, lambda i: (0, 0))

        in_specs = [
            pl.BlockSpec((tile_b, H), lambda i: (i, 0)),   # x (streamed over batch)
            inv_spec((H, H2)),                             # w1 (resident)
            inv_spec((3, H2)),                             # packed b1/gamma/beta
            inv_spec((H2, L_pad)),                         # w2 (resident, not streamed)
            inv_spec((1, L_pad)),                          # b2
        ]
        out_specs = pl.BlockSpec((tile_b, L_pad), lambda i: (i, 0))

        # VMEM limit derived from actual buffer bytes (not a blanket constant).
        n_wbuf = 1 if single_buffer else 2
        buf_bytes = (2 * tile_b * H * 4                          # x, double-buffered
                     + n_wbuf * (H * H2 + H2 * L_pad) * itemsize # w1, w2
                     + n_wbuf * (8 * H2 + 8 * L_pad) * 4         # params/b2 (sublane-padded)
                     + 2 * tile_b * L_pad * jnp.dtype(out_dtype).itemsize)
        interm_bytes = 6 * tile_b * H2 * 4                       # h/g/c/ln f32 temporaries
        vmem_limit = int(min(max((buf_bytes + interm_bytes) * 1.25 + (2 << 20),
                                 16 << 20), 60 << 20))

        return pl.pallas_call(
            _answer_head_kernel,
            out_shape=jax.ShapeDtypeStruct((B_pad, L_pad), out_dtype),
            grid_spec=pltpu.PrefetchScalarGridSpec(
                num_scalar_prefetch=0,
                grid=grid,
                in_specs=in_specs,
                out_specs=out_specs,
            ),
            compiler_params=pltpu.CompilerParams(
                dimension_semantics=("parallel",),
                vmem_limit_bytes=vmem_limit),
            cost_estimate=cost,
        )(x, w1, lnp, w2, b2)

    try:
        out = _run(single_buffer=True)
    except Exception:
        # Fallback for jax builds that reject pl.Buffered(1) on pallas_call
        # inputs: plain (double-buffered) BlockSpecs.
        out = _run(single_buffer=False)

    return out[:B, :L]


def init_answer_head_params(key, hid_dim, num_labels):
    k1, k2 = jax.random.split(key)
    # Deterministic synthetic weights (not a checkpoint load).
    w1 = jax.random.normal(k1, (hid_dim, 2 * hid_dim), jnp.float32) * 0.02
    b1 = jnp.zeros((2 * hid_dim,), jnp.float32)
    gamma = jnp.ones((2 * hid_dim,), jnp.float32)
    beta = jnp.zeros((2 * hid_dim,), jnp.float32)
    w2 = jax.random.normal(k2, (2 * hid_dim, num_labels), jnp.float32) * 0.02
    b2 = jnp.zeros((num_labels,), jnp.float32)
    return dict(w1=w1, b1=b1, gamma=gamma, beta=beta, w2=w2, b2=b2)


def _reference(x, p):
    h = x @ p["w1"] + p["b1"]
    g = 0.5 * h * (1.0 + lax.erf(h / jnp.sqrt(2.0)))
    mean = jnp.mean(g, axis=-1, keepdims=True)
    var = jnp.mean((g - mean) ** 2, axis=-1, keepdims=True)
    ln = (g - mean) / jnp.sqrt(var + 1e-12) * p["gamma"] + p["beta"]
    return ln @ p["w2"] + p["b2"]


if __name__ == "__main__":
    B = 8            # batch
    HID = 32         # small stand-in for lxmert_hid_dim=768
    NUM_LABELS = 28  # num_ans_candidates

    key = jax.random.PRNGKey(0)
    k_x, k_p = jax.random.split(key)

    # Stand-in for the LXMERT encoder's pooled_output.
    pooled_output = jax.random.normal(k_x, (B, HID), jnp.float32)
    params = init_answer_head_params(k_p, HID, NUM_LABELS)

    ref = _reference(pooled_output, params)

    # f32 weight path: matches the PyTorch head to tight tolerance.
    prepped_f32 = prepare_answer_head_params(params, compute_dtype=jnp.float32)
    score_f32 = jax.block_until_ready(lxmert_answer_head(pooled_output, prepped_f32))
    assert score_f32.shape == (B, NUM_LABELS)
    assert jnp.allclose(score_f32, ref, atol=1e-5, rtol=1e-5)

    # bf16 weight path (default; the HBM-bandwidth lever at real LXMERT dims).
    prepped_bf16 = prepare_answer_head_params(params)
    score_bf16 = jax.block_until_ready(lxmert_answer_head(pooled_output, prepped_bf16))
    assert score_bf16.shape == (B, NUM_LABELS)
    assert jnp.allclose(score_bf16, ref, atol=2e-2, rtol=2e-2)

    print("KERNEL_OK")
</pallas_src>

<mosaic_0001>
module attributes {stable_mosaic.version = 11 : i64} {
  func.func @_answer_head_kernel(%arg0: i32, %arg1: memref<8x32xf32, #tpu.memory_space<vmem>>, %arg2: memref<32x64xf32, #tpu.memory_space<vmem>>, %arg3: memref<3x64xf32, #tpu.memory_space<vmem>>, %arg4: memref<64x128xf32, #tpu.memory_space<vmem>>, %arg5: memref<1x128xf32, #tpu.memory_space<vmem>>, %arg6: memref<8x128xf32, #tpu.memory_space<vmem>>) attributes {dimension_semantics = [#tpu.dimension_semantics<parallel>], iteration_bounds = array<i64: 1>, scalar_prefetch = 0 : i64, scratch_operands = 0 : i64, tpu.core_type = #tpu.core_type<tc>, window_params = [{transform_indices = @transform_0, window_bounds = array<i64: 8, 32>}, {pipeline_mode = #tpu.pipeline_mode<synchronous>, transform_indices = @transform_1, window_bounds = array<i64: 32, 64>}, {pipeline_mode = #tpu.pipeline_mode<synchronous>, transform_indices = @transform_2, window_bounds = array<i64: 3, 64>}, {pipeline_mode = #tpu.pipeline_mode<synchronous>, transform_indices = @transform_3, window_bounds = array<i64: 64, 128>}, {pipeline_mode = #tpu.pipeline_mode<synchronous>, transform_indices = @transform_4, window_bounds = array<i64: 1, 128>}, {transform_indices = @transform_5, window_bounds = array<i64: 8, 128>}]} {
    %c0 = arith.constant 0 : index
    %c0_0 = arith.constant 0 : index
    %0 = vector.load %arg1[%c0, %c0_0] : memref<8x32xf32, #tpu.memory_space<vmem>>, vector<8x32xf32>
    %c0_1 = arith.constant 0 : index
    %c0_2 = arith.constant 0 : index
    %1 = vector.load %arg2[%c0_1, %c0_2] : memref<32x64xf32, #tpu.memory_space<vmem>>, vector<32x64xf32>
    %cst = arith.constant dense<0.000000e+00> : vector<8x64xf32>
    %2 = tpu.matmul %0, %1, %cst {dimension_numbers = #tpu.dot_dimension_numbers<[1], [0], [0], [1], [0, 0, 1, 1], [], []>} : vector<8x32xf32>, vector<32x64xf32>, vector<8x64xf32> -> vector<8x64xf32>
    %c0_3 = arith.constant 0 : index
    %c0_4 = arith.constant 0 : index
    %3 = vector.load %arg3[%c0_3, %c0_4] : memref<3x64xf32, #tpu.memory_space<vmem>>, vector<1x64xf32>
    %4 = vector.broadcast %3 : vector<1x64xf32> to vector<8x64xf32>
    %5 = arith.addf %2, %4 : vector<8x64xf32>
    %cst_5 = arith.constant 5.000000e-01 : f32
    %6 = vector.broadcast %cst_5 : f32 to vector<8x64xf32>
    %7 = arith.mulf %6, %5 : vector<8x64xf32>
    %cst_6 = arith.constant 0.707106769 : f32
    %8 = vector.broadcast %cst_6 : f32 to vector<8x64xf32>
    %9 = arith.mulf %5, %8 : vector<8x64xf32>
    %10 = math.erf %9 : vector<8x64xf32>
    %cst_7 = arith.constant 1.000000e+00 : f32
    %11 = vector.broadcast %cst_7 : f32 to vector<8x64xf32>
    %12 = arith.addf %11, %10 : vector<8x64xf32>
    %13 = arith.mulf %7, %12 : vector<8x64xf32>
    %cst_8 = arith.constant dense<0.000000e+00> : vector<8xf32>
    %14 = vector.multi_reduction <add>, %13, %cst_8 [1] : vector<8x64xf32> to vector<8xf32>
    %15 = vector.shape_cast %14 : vector<8xf32> to vector<8x1xf32>
    %cst_9 = arith.constant 6.400000e+01 : f32
    %16 = vector.broadcast %cst_9 : f32 to vector<8x1xf32>
    %17 = arith.divf %15, %16 : vector<8x1xf32>
    %18 = vector.broadcast %17 : vector<8x1xf32> to vector<8x64xf32>
    %19 = arith.subf %13, %18 : vector<8x64xf32>
    %20 = arith.mulf %19, %19 : vector<8x64xf32>
    %cst_10 = arith.constant dense<0.000000e+00> : vector<8xf32>
    %21 = vector.multi_reduction <add>, %20, %cst_10 [1] : vector<8x64xf32> to vector<8xf32>
    %22 = vector.shape_cast %21 : vector<8xf32> to vector<8x1xf32>
    %cst_11 = arith.constant 6.400000e+01 : f32
    %23 = vector.broadcast %cst_11 : f32 to vector<8x1xf32>
    %24 = arith.divf %22, %23 : vector<8x1xf32>
    %cst_12 = arith.constant 9.99999996E-13 : f32
    %25 = vector.broadcast %cst_12 : f32 to vector<8x1xf32>
    %26 = arith.addf %24, %25 : vector<8x1xf32>
    %27 = math.rsqrt %26 : vector<8x1xf32>
    %28 = vector.broadcast %27 : vector<8x1xf32> to vector<8x64xf32>
    %29 = arith.mulf %19, %28 : vector<8x64xf32>
    %c1 = arith.constant 1 : index
    %c0_13 = arith.constant 0 : index
    %30 = vector.load %arg3[%c1, %c0_13] : memref<3x64xf32, #tpu.memory_space<vmem>>, vector<1x64xf32>
    %31 = vector.broadcast %30 : vector<1x64xf32> to vector<8x64xf32>
    %32 = arith.mulf %29, %31 : vector<8x64xf32>
    %c2 = arith.constant 2 : index
    %c0_14 = arith.constant 0 : index
    %33 = vector.load %arg3[%c2, %c0_14] : memref<3x64xf32, #tpu.memory_space<vmem>>, vector<1x64xf32>
    %34 = vector.broadcast %33 : vector<1x64xf32> to vector<8x64xf32>
    %35 = arith.addf %32, %34 : vector<8x64xf32>
    %c0_15 = arith.constant 0 : index
    %c0_16 = arith.constant 0 : index
    %36 = vector.load %arg4[%c0_15, %c0_16] : memref<64x128xf32, #tpu.memory_space<vmem>>, vector<64x128xf32>
    %cst_17 = arith.constant dense<0.000000e+00> : vector<8x128xf32>
    %37 = tpu.matmul %35, %36, %cst_17 {dimension_numbers = #tpu.dot_dimension_numbers<[1], [0], [0], [1], [0, 0, 1, 1], [], []>} : vector<8x64xf32>, vector<64x128xf32>, vector<8x128xf32> -> vector<8x128xf32>
    %c0_18 = arith.constant 0 : index
    %c0_19 = arith.constant 0 : index
    %38 = vector.load %arg5[%c0_18, %c0_19] : memref<1x128xf32, #tpu.memory_space<vmem>>, vector<1x128xf32>
    %39 = vector.broadcast %38 : vector<1x128xf32> to vector<8x128xf32>
    %40 = arith.addf %37, %39 : vector<8x128xf32>
    %c0_20 = arith.constant 0 : index
    %c0_21 = arith.constant 0 : index
    %41 = vector.load %arg6[%c0_20, %c0_21] : memref<8x128xf32, #tpu.memory_space<vmem>>, vector<8x128xf32>
    tpu.vector_store %arg6[%c0_20, %c0_21], %40 {strides = array<i32>} : memref<8x128xf32, #tpu.memory_space<vmem>>, vector<8x128xf32>,
    return
  }
  func.func @transform_0(%arg0: i32) -> (i32, i32) {
    %c0_i32 = arith.constant 0 : i32
    %c0_i32_0 = arith.constant 0 : i32
    return %arg0, %c0_i32 : i32, i32
  }
  func.func @transform_1(%arg0: i32) -> (i32, i32) {
    %c0_i32 = arith.constant 0 : i32
    %c0_i32_0 = arith.constant 0 : i32
    %c0_i32_1 = arith.constant 0 : i32
    return %c0_i32, %c0_i32_0 : i32, i32
  }
  func.func @transform_2(%arg0: i32) -> (i32, i32) {
    %c0_i32 = arith.constant 0 : i32
    %c0_i32_0 = arith.constant 0 : i32
    %c0_i32_1 = arith.constant 0 : i32
    return %c0_i32, %c0_i32_0 : i32, i32
  }
  func.func @transform_3(%arg0: i32) -> (i32, i32) {
    %c0_i32 = arith.constant 0 : i32
    %c0_i32_0 = arith.constant 0 : i32
    %c0_i32_1 = arith.constant 0 : i32
    return %c0_i32, %c0_i32_0 : i32, i32
  }
  func.func @transform_4(%arg0: i32) -> (i32, i32) {
    %c0_i32 = arith.constant 0 : i32
    %c0_i32_0 = arith.constant 0 : i32
    %c0_i32_1 = arith.constant 0 : i32
    return %c0_i32, %c0_i32_0 : i32, i32
  }
  func.func @transform_5(%arg0: i32) -> (i32, i32) {
    %c0_i32 = arith.constant 0 : i32
    %c0_i32_0 = arith.constant 0 : i32
    return %arg0, %c0_i32 : i32, i32
  }
}

module attributes {stable_mosaic.version = 11 : i64} {
  func.func @_answer_head_kernel(%arg0: i32, %arg1: memref<8x32xf32, #tpu.memory_space<vmem>>, %arg2: memref<32x64xf32, #tpu.memory_space<vmem>>, %arg3: memref<3x64xf32, #tpu.memory_space<vmem>>, %arg4: memref<64x128xf32, #tpu.memory_space<vmem>>, %arg5: memref<1x128xf32, #tpu.memory_space<vmem>>, %arg6: memref<8x128xf32, #tpu.memory_space<vmem>>) attributes {dimension_semantics = [#tpu.dimension_semantics<parallel>], iteration_bounds = array<i64: 1>, scalar_prefetch = 0 : i64, scratch_operands = 0 : i64, tpu.core_type = #tpu.core_type<tc>, window_params = [{transform_indices = @transform_0, window_bounds = array<i64: 8, 32>}, {pipeline_mode = #tpu.pipeline_mode<synchronous>, transform_indices = @transform_1, window_bounds = array<i64: 32, 64>}, {pipeline_mode = #tpu.pipeline_mode<synchronous>, transform_indices = @transform_2, window_bounds = array<i64: 3, 64>}, {pipeline_mode = #tpu.pipeline_mode<synchronous>, transform_indices = @transform_3, window_bounds = array<i64: 64, 128>}, {pipeline_mode = #tpu.pipeline_mode<synchronous>, transform_indices = @transform_4, window_bounds = array<i64: 1, 128>}, {transform_indices = @transform_5, window_bounds = array<i64: 8, 128>}]} {
    %c0 = arith.constant 0 : index
    %c0_0 = arith.constant 0 : index
    %0 = vector.load %arg1[%c0, %c0_0] : memref<8x32xf32, #tpu.memory_space<vmem>>, vector<8x32xf32>
    %c0_1 = arith.constant 0 : index
    %c0_2 = arith.constant 0 : index
    %1 = vector.load %arg2[%c0_1, %c0_2] : memref<32x64xf32, #tpu.memory_space<vmem>>, vector<32x64xf32>
    %cst = arith.constant dense<0.000000e+00> : vector<8x64xf32>
    %2 = tpu.matmul %0, %1, %cst {dimension_numbers = #tpu.dot_dimension_numbers<[1], [0], [0], [1], [0, 0, 1, 1], [], []>} : vector<8x32xf32>, vector<32x64xf32>, vector<8x64xf32> -> vector<8x64xf32>
    %c0_3 = arith.constant 0 : index
    %c0_4 = arith.constant 0 : index
    %3 = vector.load %arg3[%c0_3, %c0_4] : memref<3x64xf32, #tpu.memory_space<vmem>>, vector<1x64xf32>
    %4 = vector.broadcast %3 : vector<1x64xf32> to vector<8x64xf32>
    %5 = arith.addf %2, %4 : vector<8x64xf32>
    %cst_5 = arith.constant 5.000000e-01 : f32
    %6 = vector.broadcast %cst_5 : f32 to vector<8x64xf32>
    %7 = arith.mulf %6, %5 : vector<8x64xf32>
    %cst_6 = arith.constant 0.707106769 : f32
    %8 = vector.broadcast %cst_6 : f32 to vector<8x64xf32>
    %9 = arith.mulf %5, %8 : vector<8x64xf32>
    %10 = math.erf %9 : vector<8x64xf32>
    %cst_7 = arith.constant 1.000000e+00 : f32
    %11 = vector.broadcast %cst_7 : f32 to vector<8x64xf32>
    %12 = arith.addf %11, %10 : vector<8x64xf32>
    %13 = arith.mulf %7, %12 : vector<8x64xf32>
    %cst_8 = arith.constant dense<0.000000e+00> : vector<8xf32>
    %14 = vector.multi_reduction <add>, %13, %cst_8 [1] : vector<8x64xf32> to vector<8xf32>
    %15 = vector.shape_cast %14 : vector<8xf32> to vector<8x1xf32>
    %cst_9 = arith.constant 6.400000e+01 : f32
    %16 = vector.broadcast %cst_9 : f32 to vector<8x1xf32>
    %17 = arith.divf %15, %16 : vector<8x1xf32>
    %18 = vector.broadcast %17 : vector<8x1xf32> to vector<8x64xf32>
    %19 = arith.subf %13, %18 : vector<8x64xf32>
    %20 = arith.mulf %19, %19 : vector<8x64xf32>
    %cst_10 = arith.constant dense<0.000000e+00> : vector<8xf32>
    %21 = vector.multi_reduction <add>, %20, %cst_10 [1] : vector<8x64xf32> to vector<8xf32>
    %22 = vector.shape_cast %21 : vector<8xf32> to vector<8x1xf32>
    %cst_11 = arith.constant 6.400000e+01 : f32
    %23 = vector.broadcast %cst_11 : f32 to vector<8x1xf32>
    %24 = arith.divf %22, %23 : vector<8x1xf32>
    %cst_12 = arith.constant 9.99999996E-13 : f32
    %25 = vector.broadcast %cst_12 : f32 to vector<8x1xf32>
    %26 = arith.addf %24, %25 : vector<8x1xf32>
    %27 = math.rsqrt %26 : vector<8x1xf32>
    %28 = vector.broadcast %27 : vector<8x1xf32> to vector<8x64xf32>
    %29 = arith.mulf %19, %28 : vector<8x64xf32>
    %c1 = arith.constant 1 : index
    %c0_13 = arith.constant 0 : index
    %30 = vector.load %arg3[%c1, %c0_13] : memref<3x64xf32, #tpu.memory_space<vmem>>, vector<1x64xf32>
    %31 = vector.broadcast %30 : vector<1x64xf32> to vector<8x64xf32>
    %32 = arith.mulf %29, %31 : vector<8x64xf32>
    %c2 = arith.constant 2 : index
    %c0_14 = arith.constant 0 : index
    %33 = vector.load %arg3[%c2, %c0_14] : memref<3x64xf32, #tpu.memory_space<vmem>>, vector<1x64xf32>
    %34 = vector.broadcast %33 : vector<1x64xf32> to vector<8x64xf32>
    %35 = arith.addf %32, %34 : vector<8x64xf32>
    %c0_15 = arith.constant 0 : index
    %c0_16 = arith.constant 0 : index
    %36 = vector.load %arg4[%c0_15, %c0_16] : memref<64x128xf32, #tpu.memory_space<vmem>>, vector<64x128xf32>
    %cst_17 = arith.constant dense<0.000000e+00> : vector<8x128xf32>
    %37 = tpu.matmul %35, %36, %cst_17 {dimension_numbers = #tpu.dot_dimension_numbers<[1], [0], [0], [1], [0, 0, 1, 1], [], []>} : vector<8x64xf32>, vector<64x128xf32>, vector<8x128xf32> -> vector<8x128xf32>
    %c0_18 = arith.constant 0 : index
    %c0_19 = arith.constant 0 : index
    %38 = vector.load %arg5[%c0_18, %c0_19] : memref<1x128xf32, #tpu.memory_space<vmem>>, vector<1x128xf32>
    %39 = vector.broadcast %38 : vector<1x128xf32> to vector<8x128xf32>
    %40 = arith.addf %37, %39 : vector<8x128xf32>
    %c0_20 = arith.constant 0 : index
    %c0_21 = arith.constant 0 : index
    %41 = vector.load %arg6[%c0_20, %c0_21] : memref<8x128xf32, #tpu.memory_space<vmem>>, vector<8x128xf32>
    tpu.vector_store %arg6[%c0_20, %c0_21], %40 {strides = array<i32>} : memref<8x128xf32, #tpu.memory_space<vmem>>, vector<8x128xf32>,
    return
  }
  func.func @transform_0(%arg0: i32) -> (i32, i32) {
    %c0_i32 = arith.constant 0 : i32
    %c0_i32_0 = arith.constant 0 : i32
    return %arg0, %c0_i32 : i32, i32
  }
  func.func @transform_1(%arg0: i32) -> (i32, i32) {
    %c0_i32 = arith.constant 0 : i32
    %c0_i32_0 = arith.constant 0 : i32
    %c0_i32_1 = arith.constant 0 : i32
    return %c0_i32, %c0_i32_0 : i32, i32
  }
  func.func @transform_2(%arg0: i32) -> (i32, i32) {
    %c0_i32 = arith.constant 0 : i32
    %c0_i32_0 = arith.constant 0 : i32
    %c0_i32_1 = arith.constant 0 : i32
    return %c0_i32, %c0_i32_0 : i32, i32
  }
  func.func @transform_3(%arg0: i32) -> (i32, i32) {
    %c0_i32 = arith.constant 0 : i32
    %c0_i32_0 = arith.constant 0 : i32
    %c0_i32_1 = arith.constant 0 : i32
    return %c0_i32, %c0_i32_0 : i32, i32
  }
  func.func @transform_4(%arg0: i32) -> (i32, i32) {
    %c0_i32 = arith.constant 0 : i32
    %c0_i32_0 = arith.constant 0 : i32
    %c0_i32_1 = arith.constant 0 : i32
    return %c0_i32, %c0_i32_0 : i32, i32
  }
  func.func @transform_5(%arg0: i32) -> (i32, i32) {
    %c0_i32 = arith.constant 0 : i32
    %c0_i32_0 = arith.constant 0 : i32
    return %arg0, %c0_i32 : i32, i32
  }
}

</mosaic_0001>

<llo_original>
// kernel: tpu_custom_call.1
$region0: #{tpu_custom_call.1}
  #allocation0 [shape = 'u32[]', space=smem, size = 0x4, offset = 0x4, fixed_abs, tag = 'smem constant byte address 0x4 - core index']
  #allocation1 [shape = 'u32[144,128]{1,0:T(1,128)}', space=vmem, size = 0x12000, scoped, tag = 'internal scratch']
  %s0 = inlined_call_operand.hbm [shape: f32[8,32], index: 0, kind: input, shape index: {}]
  %s1 = inlined_call_operand.hbm [shape: f32[32,64], index: 1, kind: input, shape index: {}]
  %s2 = inlined_call_operand.vmem [shape: f32[3,64], index: 2, kind: input, shape index: {}]
  %s3 = inlined_call_operand.hbm [shape: f32[64,128], index: 3, kind: input, shape index: {}]
  %s4 = inlined_call_operand.vmem [shape: f32[1,128], index: 4, kind: input, shape index: {}]
  %s5 = inlined_call_operand.hbm [shape: f32[8,128], index: 5, kind: output, shape index: {}]
  %s6 = sld [smem:[#allocation0]]
  $region42: #{tpu_custom_call.1} parent=0
    _
  %s8 = ssub.s32 1, %s6
  %s9 = scalar_select 0, %s8, %s6
  $region1: #{tpu_custom_call.1} parent=0
    #allocation2 [shape = 'u8[4096]{0}', space=vmem, size = 0x1000, scoped, tag = 'input window, operand 0, single buffered']
    #allocation3 [shape = 's32[1]{0}', space=sflag, size = 0x4, scoped, tag = 'scoped memory for tpu_custom_call.1']
    #allocation4 [shape = 's32[1]{0}', space=sflag, size = 0x4, scoped, tag = 'scoped memory for tpu_custom_call.1']
    #allocation5 [shape = 'u8[16384]{0}', space=vmem, size = 0x4000, scoped, tag = 'input window, operand 1, single buffered']
    #allocation6 [shape = 's32[1]{0}', space=sflag, size = 0x4, scoped, tag = 'scoped memory for tpu_custom_call.1']
    #allocation7 [shape = 'u8[32768]{0}', space=vmem, size = 0x8000, scoped, tag = 'input window, operand 3, single buffered']
    #allocation8 [shape = 'u8[4096]{0}', space=vmem, size = 0x1000, scoped, tag = 'output window, operand 0, single buffered']
    %10 = vsyncpa [#allocation3], 0
    %11 = vsyncpa [#allocation6], 0
    %12 = vsyncpa [#allocation4], 0
    // Predicated region
    $region2: #{tpu_custom_call.1} parent=1 // pred_check
      _
    $region3: #{tpu_custom_call.1} parent=1 // pred_check_branch
      %14 = sbr.rel (0) target = $region5
    $region4: #{tpu_custom_call.1} parent=1 // pred_region
      %s16 = ssub.s32 128, 128
      %17 = vsyncadd [#allocation3], %s16
      %s19 = sshll.u32 [#allocation2], 4
      %s20 = int_to_ptr.vmem [resolvable:$true] %s19
      %22 = dma.hbm_to_vmem [thread:$0]  %s0, 128, %s20, [#allocation3]
    $region5: #{tpu_custom_call.1} parent=1 // pred_fallthru
      _
    // Predicated region
    $region6: #{tpu_custom_call.1} parent=1 // pred_check
      _
    $region7: #{tpu_custom_call.1} parent=1 // pred_check_branch
      %24 = sbr.rel (0) target = $region9
    $region8: #{tpu_custom_call.1} parent=1 // pred_region
      %s26 = ssub.s32 512, 512
      %27 = vsyncadd [#allocation6], %s26
      %s28 = sshll.u32 [#allocation5], 4
      %s29 = int_to_ptr.vmem [resolvable:$true] %s28
      %34 = dma.hbm_to_vmem [thread:$0]  %s1, 512, %s29, [#allocation6], 128, 128, 8
    $region9: #{tpu_custom_call.1} parent=1 // pred_fallthru
      _
    // Predicated region
    $region10: #{tpu_custom_call.1} parent=1 // pred_check
      _
    $region11: #{tpu_custom_call.1} parent=1 // pred_check_branch
      %36 = sbr.rel (0) target = $region13
    $region12: #{tpu_custom_call.1} parent=1 // pred_region
      _
    $region13: #{tpu_custom_call.1} parent=1 // pred_fallthru
      _
    // Predicated region
    $region14: #{tpu_custom_call.1} parent=1 // pred_check
      _
    $region15: #{tpu_custom_call.1} parent=1 // pred_check_branch
      %38 = sbr.rel (0) target = $region17
    $region16: #{tpu_custom_call.1} parent=1 // pred_region
      %s40 = ssub.s32 1024, 1024
      %41 = vsyncadd [#allocation6], %s40
      %s42 = sshll.u32 [#allocation7], 4
      %s43 = int_to_ptr.vmem [resolvable:$true] %s42
      %48 = dma.hbm_to_vmem [thread:$0]  %s3, 1024, %s43, [#allocation6], 128, 128, 8
    $region17: #{tpu_custom_call.1} parent=1 // pred_fallthru
      _
    // Predicated region
    $region18: #{tpu_custom_call.1} parent=1 // pred_check
      _
    $region19: #{tpu_custom_call.1} parent=1 // pred_check_branch
      %50 = sbr.rel (0) target = $region21
    $region20: #{tpu_custom_call.1} parent=1 // pred_region
      _
    $region21: #{tpu_custom_call.1} parent=1 // pred_fallthru
      _
    // Predicated region
    $region22: #{tpu_custom_call.1} parent=1 // pred_check
      _
    $region23: #{tpu_custom_call.1} parent=1 // pred_check_branch
      %52 = sbr.rel (0) target = $region25
    $region24: #{tpu_custom_call.1} parent=1 // pred_region
      %53 = dma.done [#allocation3], 128
    $region25: #{tpu_custom_call.1} parent=1 // pred_fallthru
      _
    // Predicated region
    $region26: #{tpu_custom_call.1} parent=1 // pred_check
      _
    $region27: #{tpu_custom_call.1} parent=1 // pred_check_branch
      %55 = sbr.rel (0) target = $region29
    $region28: #{tpu_custom_call.1} parent=1 // pred_region
      %56 = dma.done [#allocation6], 512
    $region29: #{tpu_custom_call.1} parent=1 // pred_fallthru
      _
    // Predicated region
    $region30: #{tpu_custom_call.1} parent=1 // pred_check
      _
    $region31: #{tpu_custom_call.1} parent=1 // pred_check_branch
      %58 = sbr.rel (0) target = $region33
    $region32: #{tpu_custom_call.1} parent=1 // pred_region
      %59 = dma.done [#allocation6], 1024
    $region33: #{tpu_custom_call.1} parent=1 // pred_fallthru
      _
    %v60 = vld [vmem:[#allocation2] sm:$0xff]
    %v61 = vld [vmem:[#allocation5] sm:$0xff]
    %v62 = vld [vmem:[#allocation5 + $0x8] sm:$0xff]
    %v63 = vld [vmem:[#allocation5 + $0x10] sm:$0xff]
    %v64 = vld [vmem:[#allocation5 + $0x18] sm:$0xff]
    %v65 = vld [vmem:[%s2] sm:$0x1]
    %v66 = vlaneseq
    %v67 = vshrl.u32 %v66, 7
    %v68 = vsub.s32 0, %v67
    %v69 = vrot.slane %v65, %v68
    %vm70 = vcmask 261120
    %v72 = vsel %vm70, %v60, 0
    %74 = vmatprep.subr.mxu0 0.0
    %75 = vmatpush1.msra.mxu0 %v61
    %76 = vmatprep.subr.mxu0 0.0
    %77 = vmatpush1.msra.mxu0 %v62
    %78 = vmatprep.subr.mxu0 0.0
    %79 = vmatpush1.msra.mxu0 %v63
    %80 = vmatprep.subr.mxu0 0.0
    %81 = vmatpush1.msra.mxu0 %v64
    %82 = vmatprep.subr.mxu0 0.0
    %83 = vmatpush1.msra.mxu0 0.0
    %84 = vmatprep.subr.mxu0 0.0
    %85 = vmatpush1.msra.mxu0 0.0
    %86 = vmatprep.subr.mxu0 0.0
    %87 = vmatpush1.msra.mxu0 0.0
    %88 = vmatprep.subr.mxu0 0.0
    %89 = vmatpush1.msra.mxu0 0.0
    %90 = vmatprep.subr.mxu0 0.0
    %91 = vmatpush1.msra.mxu0 0.0
    %92 = vmatprep.subr.mxu0 0.0
    %93 = vmatpush1.msra.mxu0 0.0
    %94 = vmatprep.subr.mxu0 0.0
    %95 = vmatpush1.msra.mxu0 0.0
    %96 = vmatprep.subr.mxu0 0.0
    %97 = vmatpush1.msra.mxu0 0.0
    %98 = vmatprep.subr.mxu0 0.0
    %99 = vmatpush1.msra.mxu0 0.0
    %100 = vmatprep.subr.mxu0 0.0
    %101 = vmatpush1.msra.mxu0 0.0
    %102 = vmatprep.subr.mxu0 0.0
    %103 = vmatpush1.msra.mxu0 0.0
    %104 = vmatprep.subr.mxu0 0.0
    %105 = vmatpush1.msra.mxu0 0.0
    %106 = vmatprep.subr.mxu0 0.0
    %107 = vmatpush1.msra.mxu0 0.0
    %108 = vmatprep.subr.mxu0 0.0
    %109 = vmatpush1.msra.mxu0 0.0
    %110 = vmatprep.subr.mxu0 0.0
    %111 = vmatpush1.msra.mxu0 0.0
    %112 = vmatprep.subr.mxu0 0.0
    %113 = vmatpush1.msra.mxu0 0.0
    %114 = vmatprep.subr.mxu0 0.0
    %115 = vmatpush1.msra.mxu0 0.0
    %116 = vmatprep.subr.mxu0 0.0
    %117 = vmatpush1.msra.mxu0 0.0
    %118 = vmatprep.subr.mxu0 0.0
    %119 = vmatpush1.msra.mxu0 0.0
    %120 = vmatprep.subr.mxu0 0.0
    %121 = vmatpush1.msra.mxu0 0.0
    %122 = vmatprep.subr.mxu0 0.0
    %123 = vmatpush1.msra.mxu0 0.0
    %124 = vmatprep.subr.mxu0 0.0
    %125 = vmatpush1.msra.mxu0 0.0
    %126 = vmatprep.subr.mxu0 0.0
    %127 = vmatpush1.msra.mxu0 0.0
    %128 = vmatprep.subr.mxu0 0.0
    %129 = vmatpush1.msra.mxu0 0.0
    %130 = vmatprep.subr.mxu0 0.0
    %131 = vmatpush1.msra.mxu0 0.0
    %132 = vmatprep.subr.mxu0 0.0
    %133 = vmatpush1.msra.mxu0 0.0
    %134 = vmatprep.subr.mxu0 0.0
    %135 = vmatpush1.msra.mxu0 0.0
    %136 = vmatprep.subr.mxu0 0.0
    %137 = vmatpush1.msra.mxu0 0.0
    %138 = vmatprep.mubr.f32.mxu0 0.0
    %139 = vmatmul.mubr.f32.gmra.mrb[0].mxu0 %v72
    %v140 = vpop.f32.mrb[0].mxu0
    %v141 = vadd.f32 %v69, %v140
    %v142 = vpop.f32.mrb[0].mxu0
    %143 = vdwg.mxu0
    %v144 = vmul.f32 %v141, 0.5
    %v145 = vmul.f32 %v141, 0.70710677
    %v146 = verf.f32.pop %v145
    %v147 = vadd.f32 %v146, 1.0
    %v148 = vmul.f32 %v144, %v147
    %vm149 = vcmask 523264
    %v150 = vsel %vm149, %v148, 0.0
    %151 = vadd.xlane.f32.xlu0 %v150
    %v152 = vpop.xlane.xlu0 %151
    %v153 = vrcp.pop 64.0
    %v154 = vmul.f32 %v152, %v153
    %v155 = vsub.f32 %v148, %v154
    %v156 = vmul.f32 %v155, %v155
    %v157 = vsel %vm149, %v156, 0.0
    %158 = vadd.xlane.f32.xlu0 %v157
    %v159 = vpop.xlane.xlu0 %158
    %v160 = vmul.f32 %v159, %v153
    %v161 = vadd.f32 %v160, 1e-12
    %v162 = vrsqrt.pop %v161
    %v163 = vmul.f32 %v155, %v162
    %v164 = vld [vmem:[%s2 + $0x1] sm:$0x1]
    %v165 = vlaneseq
    %v166 = vshrl.u32 %v165, 7
    %v167 = vsub.s32 0, %v166
    %v168 = vrot.slane %v164, %v167
    %v169 = vmul.f32 %v163, %v168
    %v170 = vld [vmem:[%s2 + $0x2] sm:$0x1]
    %v171 = vlaneseq
    %v172 = vshrl.u32 %v171, 7
    %v173 = vsub.s32 0, %v172
    %v174 = vrot.slane %v170, %v173
    %v175 = vadd.f32 %v169, %v174
    %v176 = vld [vmem:[#allocation7] sm:$0xff]
    %v177 = vld [vmem:[#allocation7 + $0x8] sm:$0xff]
    %v178 = vld [vmem:[#allocation7 + $0x10] sm:$0xff]
    %v179 = vld [vmem:[#allocation7 + $0x18] sm:$0xff]
    %v180 = vld [vmem:[#allocation7 + $0x20] sm:$0xff]
    %v181 = vld [vmem:[#allocation7 + $0x28] sm:$0xff]
    %v182 = vld [vmem:[#allocation7 + $0x30] sm:$0xff]
    %v183 = vld [vmem:[#allocation7 + $0x38] sm:$0xff]
    %v184 = vld [vmem:[%s4] sm:$0x1]
    %v186 = vlaneseq
    %v187 = vshrl.u32 %v186, 7
    %v188 = vsub.s32 0, %v187
    %v189 = vrot.slane %v184, %v188
    %v192 = vsel %vm149, %v175, 0
    %194 = vmatprep.subr.mxu0 0.0
    %195 = vmatpush1.msra.mxu0 %v176
    %196 = vmatprep.subr.mxu0 0.0
    %197 = vmatpush1.msra.mxu0 %v177
    %198 = vmatprep.subr.mxu0 0.0
    %199 = vmatpush1.msra.mxu0 %v178
    %200 = vmatprep.subr.mxu0 0.0
    %201 = vmatpush1.msra.mxu0 %v179
    %202 = vmatprep.subr.mxu0 0.0
    %203 = vmatpush1.msra.mxu0 %v180
    %204 = vmatprep.subr.mxu0 0.0
    %205 = vmatpush1.msra.mxu0 %v181
    %206 = vmatprep.subr.mxu0 0.0
    %207 = vmatpush1.msra.mxu0 %v182
    %208 = vmatprep.subr.mxu0 0.0
    %209 = vmatpush1.msra.mxu0 %v183
    %210 = vmatprep.subr.mxu0 0.0
    %211 = vmatpush1.msra.mxu0 0.0
    %212 = vmatprep.subr.mxu0 0.0
    %213 = vmatpush1.msra.mxu0 0.0
    %214 = vmatprep.subr.mxu0 0.0
    %215 = vmatpush1.msra.mxu0 0.0
    %216 = vmatprep.subr.mxu0 0.0
    %217 = vmatpush1.msra.mxu0 0.0
    %218 = vmatprep.subr.mxu0 0.0
    %219 = vmatpush1.msra.mxu0 0.0
    %220 = vmatprep.subr.mxu0 0.0
    %221 = vmatpush1.msra.mxu0 0.0
    %222 = vmatprep.subr.mxu0 0.0
    %223 = vmatpush1.msra.mxu0 0.0
    %224 = vmatprep.subr.mxu0 0.0
    %225 = vmatpush1.msra.mxu0 0.0
    %226 = vmatprep.subr.mxu0 0.0
    %227 = vmatpush1.msra.mxu0 0.0
    %228 = vmatprep.subr.mxu0 0.0
    %229 = vmatpush1.msra.mxu0 0.0
    %230 = vmatprep.subr.mxu0 0.0
    %231 = vmatpush1.msra.mxu0 0.0
    %232 = vmatprep.subr.mxu0 0.0
    %233 = vmatpush1.msra.mxu0 0.0
    %234 = vmatprep.subr.mxu0 0.0
    %235 = vmatpush1.msra.mxu0 0.0
    %236 = vmatprep.subr.mxu0 0.0
    %237 = vmatpush1.msra.mxu0 0.0
    %238 = vmatprep.subr.mxu0 0.0
    %239 = vmatpush1.msra.mxu0 0.0
    %240 = vmatprep.subr.mxu0 0.0
    %241 = vmatpush1.msra.mxu0 0.0
    %242 = vmatprep.subr.mxu0 0.0
    %243 = vmatpush1.msra.mxu0 0.0
    %244 = vmatprep.subr.mxu0 0.0
    %245 = vmatpush1.msra.mxu0 0.0
    %246 = vmatprep.subr.mxu0 0.0
    %247 = vmatpush1.msra.mxu0 0.0
    %248 = vmatprep.subr.mxu0 0.0
    %249 = vmatpush1.msra.mxu0 0.0
    %250 = vmatprep.subr.mxu0 0.0
    %251 = vmatpush1.msra.mxu0 0.0
    %252 = vmatprep.subr.mxu0 0.0
    %253 = vmatpush1.msra.mxu0 0.0
    %254 = vmatprep.subr.mxu0 0.0
    %255 = vmatpush1.msra.mxu0 0.0
    %256 = vmatprep.subr.mxu0 0.0
    %257 = vmatpush1.msra.mxu0 0.0
    %258 = vmatprep.mubr.f32.mxu0 0.0
    %259 = vmatmul.mubr.f32.gmra.mrb[0].mxu0 %v192
    %v260 = vpop.f32.mrb[0].mxu0
    %v261 = vadd.f32 %v189, %v260
    %v262 = vpop.f32.mrb[0].mxu0
    %263 = vdwg.mxu0
    %264 = vst [vmem:[#allocation8] sm:$0xff] %v261
    // Predicated region
    $region34: #{tpu_custom_call.1} parent=1 // pred_check
      _
    $region35: #{tpu_custom_call.1} parent=1 // pred_check_branch
      %266 = sbr.rel (0) target = $region37
    $region36: #{tpu_custom_call.1} parent=1 // pred_region
      %s268 = ssub.s32 128, 128
      %269 = vsyncadd [#allocation4], %s268
      %s271 = sshll.u32 [#allocation8], 4
      %s272 = int_to_ptr.vmem [resolvable:$true] %s271
      %274 = dma.vmem_to_hbm [thread:$0]  %s272, 128, %s5, [#allocation4]
    $region37: #{tpu_custom_call.1} parent=1 // pred_fallthru
      _
    // Predicated region
    $region38: #{tpu_custom_call.1} parent=1 // pred_check
      _
    $region39: #{tpu_custom_call.1} parent=1 // pred_check_branch
      %276 = sbr.rel (0) target = $region41
    $region40: #{tpu_custom_call.1} parent=1 // pred_region
      %277 = dma.done [#allocation4], 128
    $region41: #{tpu_custom_call.1} parent=1 // pred_fallthru
      _
    %278 = vsyncpa [#allocation3], 1
    %279 = vsyncpa [#allocation6], 1
    %280 = vsyncpa [#allocation4], 1

// kernel: tpu_custom_call.1
$region0: #{tpu_custom_call.1}
  #allocation0 [shape = 'u32[]', space=smem, size = 0x4, offset = 0x4, fixed_abs, tag = 'smem constant byte address 0x4 - core index']
  #allocation1 [shape = 'u32[144,128]{1,0:T(1,128)}', space=vmem, size = 0x12000, scoped, tag = 'internal scratch']
  %s0 = inlined_call_operand.hbm [shape: f32[8,32], index: 0, kind: input, shape index: {}]
  %s1 = inlined_call_operand.hbm [shape: f32[32,64], index: 1, kind: input, shape index: {}]
  %s2 = inlined_call_operand.vmem [shape: f32[3,64], index: 2, kind: input, shape index: {}]
  %s3 = inlined_call_operand.hbm [shape: f32[64,128], index: 3, kind: input, shape index: {}]
  %s4 = inlined_call_operand.vmem [shape: f32[1,128], index: 4, kind: input, shape index: {}]
  %s5 = inlined_call_operand.hbm [shape: f32[8,128], index: 5, kind: output, shape index: {}]
  %s6 = sld [smem:[#allocation0]]
  $region42: #{tpu_custom_call.1} parent=0
    _
  %s8 = ssub.s32 1, %s6
  %s9 = scalar_select 0, %s8, %s6
  $region1: #{tpu_custom_call.1} parent=0
    #allocation2 [shape = 'u8[4096]{0}', space=vmem, size = 0x1000, scoped, tag = 'input window, operand 0, single buffered']
    #allocation3 [shape = 's32[1]{0}', space=sflag, size = 0x4, scoped, tag = 'scoped memory for tpu_custom_call.1']
    #allocation4 [shape = 's32[1]{0}', space=sflag, size = 0x4, scoped, tag = 'scoped memory for tpu_custom_call.1']
    #allocation5 [shape = 'u8[16384]{0}', space=vmem, size = 0x4000, scoped, tag = 'input window, operand 1, single buffered']
    #allocation6 [shape = 's32[1]{0}', space=sflag, size = 0x4, scoped, tag = 'scoped memory for tpu_custom_call.1']
    #allocation7 [shape = 'u8[32768]{0}', space=vmem, size = 0x8000, scoped, tag = 'input window, operand 3, single buffered']
    #allocation8 [shape = 'u8[4096]{0}', space=vmem, size = 0x1000, scoped, tag = 'output window, operand 0, single buffered']
    %10 = vsyncpa [#allocation3], 0
    %11 = vsyncpa [#allocation6], 0
    %12 = vsyncpa [#allocation4], 0
    // Predicated region
    $region2: #{tpu_custom_call.1} parent=1 // pred_check
      _
    $region3: #{tpu_custom_call.1} parent=1 // pred_check_branch
      %14 = sbr.rel (0) target = $region5
    $region4: #{tpu_custom_call.1} parent=1 // pred_region
      %s16 = ssub.s32 128, 128
      %17 = vsyncadd [#allocation3], %s16
      %s19 = sshll.u32 [#allocation2], 4
      %s20 = int_to_ptr.vmem [resolvable:$true] %s19
      %22 = dma.hbm_to_vmem [thread:$0]  %s0, 128, %s20, [#allocation3]
    $region5: #{tpu_custom_call.1} parent=1 // pred_fallthru
      _
    // Predicated region
    $region6: #{tpu_custom_call.1} parent=1 // pred_check
      _
    $region7: #{tpu_custom_call.1} parent=1 // pred_check_branch
      %24 = sbr.rel (0) target = $region9
    $region8: #{tpu_custom_call.1} parent=1 // pred_region
      %s26 = ssub.s32 512, 512
      %27 = vsyncadd [#allocation6], %s26
      %s28 = sshll.u32 [#allocation5], 4
      %s29 = int_to_ptr.vmem [resolvable:$true] %s28
      %34 = dma.hbm_to_vmem [thread:$0]  %s1, 512, %s29, [#allocation6], 128, 128, 8
    $region9: #{tpu_custom_call.1} parent=1 // pred_fallthru
      _
    // Predicated region
    $region10: #{tpu_custom_call.1} parent=1 // pred_check
      _
    $region11: #{tpu_custom_call.1} parent=1 // pred_check_branch
      %36 = sbr.rel (0) target = $region13
    $region12: #{tpu_custom_call.1} parent=1 // pred_region
      _
    $region13: #{tpu_custom_call.1} parent=1 // pred_fallthru
      _
    // Predicated region
    $region14: #{tpu_custom_call.1} parent=1 // pred_check
      _
    $region15: #{tpu_custom_call.1} parent=1 // pred_check_branch
      %38 = sbr.rel (0) target = $region17
    $region16: #{tpu_custom_call.1} parent=1 // pred_region
      %s40 = ssub.s32 1024, 1024
      %41 = vsyncadd [#allocation6], %s40
      %s42 = sshll.u32 [#allocation7], 4
      %s43 = int_to_ptr.vmem [resolvable:$true] %s42
      %48 = dma.hbm_to_vmem [thread:$0]  %s3, 1024, %s43, [#allocation6], 128, 128, 8
    $region17: #{tpu_custom_call.1} parent=1 // pred_fallthru
      _
    // Predicated region
    $region18: #{tpu_custom_call.1} parent=1 // pred_check
      _
    $region19: #{tpu_custom_call.1} parent=1 // pred_check_branch
      %50 = sbr.rel (0) target = $region21
    $region20: #{tpu_custom_call.1} parent=1 // pred_region
      _
    $region21: #{tpu_custom_call.1} parent=1 // pred_fallthru
      _
    // Predicated region
    $region22: #{tpu_custom_call.1} parent=1 // pred_check
      _
    $region23: #{tpu_custom_call.1} parent=1 // pred_check_branch
      %52 = sbr.rel (0) target = $region25
    $region24: #{tpu_custom_call.1} parent=1 // pred_region
      %53 = dma.done [#allocation3], 128
    $region25: #{tpu_custom_call.1} parent=1 // pred_fallthru
      _
    // Predicated region
    $region26: #{tpu_custom_call.1} parent=1 // pred_check
      _
    $region27: #{tpu_custom_call.1} parent=1 // pred_check_branch
      %55 = sbr.rel (0) target = $region29
    $region28: #{tpu_custom_call.1} parent=1 // pred_region
      %56 = dma.done [#allocation6], 512
    $region29: #{tpu_custom_call.1} parent=1 // pred_fallthru
      _
    // Predicated region
    $region30: #{tpu_custom_call.1} parent=1 // pred_check
      _
    $region31: #{tpu_custom_call.1} parent=1 // pred_check_branch
      %58 = sbr.rel (0) target = $region33
    $region32: #{tpu_custom_call.1} parent=1 // pred_region
      %59 = dma.done [#allocation6], 1024
    $region33: #{tpu_custom_call.1} parent=1 // pred_fallthru
      _
    %v60 = vld [vmem:[#allocation2] sm:$0xff]
    %v61 = vld [vmem:[#allocation5] sm:$0xff]
    %v62 = vld [vmem:[#allocation5 + $0x8] sm:$0xff]
    %v63 = vld [vmem:[#allocation5 + $0x10] sm:$0xff]
    %v64 = vld [vmem:[#allocation5 + $0x18] sm:$0xff]
    %v65 = vld [vmem:[%s2] sm:$0x1]
    %v66 = vlaneseq
    %v67 = vshrl.u32 %v66, 7
    %v68 = vsub.s32 0, %v67
    %v69 = vrot.slane %v65, %v68
    %vm70 = vcmask 261120
    %v72 = vsel %vm70, %v60, 0
    %74 = vmatprep.subr.mxu0 0.0
    %75 = vmatpush1.msra.mxu0 %v61
    %76 = vmatprep.subr.mxu0 0.0
    %77 = vmatpush1.msra.mxu0 %v62
    %78 = vmatprep.subr.mxu0 0.0
    %79 = vmatpush1.msra.mxu0 %v63
    %80 = vmatprep.subr.mxu0 0.0
    %81 = vmatpush1.msra.mxu0 %v64
    %82 = vmatprep.subr.mxu0 0.0
    %83 = vmatpush1.msra.mxu0 0.0
    %84 = vmatprep.subr.mxu0 0.0
    %85 = vmatpush1.msra.mxu0 0.0
    %86 = vmatprep.subr.mxu0 0.0
    %87 = vmatpush1.msra.mxu0 0.0
    %88 = vmatprep.subr.mxu0 0.0
    %89 = vmatpush1.msra.mxu0 0.0
    %90 = vmatprep.subr.mxu0 0.0
    %91 = vmatpush1.msra.mxu0 0.0
    %92 = vmatprep.subr.mxu0 0.0
    %93 = vmatpush1.msra.mxu0 0.0
    %94 = vmatprep.subr.mxu0 0.0
    %95 = vmatpush1.msra.mxu0 0.0
    %96 = vmatprep.subr.mxu0 0.0
    %97 = vmatpush1.msra.mxu0 0.0
    %98 = vmatprep.subr.mxu0 0.0
    %99 = vmatpush1.msra.mxu0 0.0
    %100 = vmatprep.subr.mxu0 0.0
    %101 = vmatpush1.msra.mxu0 0.0
    %102 = vmatprep.subr.mxu0 0.0
    %103 = vmatpush1.msra.mxu0 0.0
    %104 = vmatprep.subr.mxu0 0.0
    %105 = vmatpush1.msra.mxu0 0.0
    %106 = vmatprep.subr.mxu0 0.0
    %107 = vmatpush1.msra.mxu0 0.0
    %108 = vmatprep.subr.mxu0 0.0
    %109 = vmatpush1.msra.mxu0 0.0
    %110 = vmatprep.subr.mxu0 0.0
    %111 = vmatpush1.msra.mxu0 0.0
    %112 = vmatprep.subr.mxu0 0.0
    %113 = vmatpush1.msra.mxu0 0.0
    %114 = vmatprep.subr.mxu0 0.0
    %115 = vmatpush1.msra.mxu0 0.0
    %116 = vmatprep.subr.mxu0 0.0
    %117 = vmatpush1.msra.mxu0 0.0
    %118 = vmatprep.subr.mxu0 0.0
    %119 = vmatpush1.msra.mxu0 0.0
    %120 = vmatprep.subr.mxu0 0.0
    %121 = vmatpush1.msra.mxu0 0.0
    %122 = vmatprep.subr.mxu0 0.0
    %123 = vmatpush1.msra.mxu0 0.0
    %124 = vmatprep.subr.mxu0 0.0
    %125 = vmatpush1.msra.mxu0 0.0
    %126 = vmatprep.subr.mxu0 0.0
    %127 = vmatpush1.msra.mxu0 0.0
    %128 = vmatprep.subr.mxu0 0.0
    %129 = vmatpush1.msra.mxu0 0.0
    %130 = vmatprep.subr.mxu0 0.0
    %131 = vmatpush1.msra.mxu0 0.0
    %132 = vmatprep.subr.mxu0 0.0
    %133 = vmatpush1.msra.mxu0 0.0
    %134 = vmatprep.subr.mxu0 0.0
    %135 = vmatpush1.msra.mxu0 0.0
    %136 = vmatprep.subr.mxu0 0.0
    %137 = vmatpush1.msra.mxu0 0.0
    %138 = vmatprep.mubr.f32.mxu0 0.0
    %139 = vmatmul.mubr.f32.gmra.mrb[0].mxu0 %v72
    %v140 = vpop.f32.mrb[0].mxu0
    %v141 = vadd.f32 %v69, %v140
    %v142 = vpop.f32.mrb[0].mxu0
    %143 = vdwg.mxu0
    %v144 = vmul.f32 %v141, 0.5
    %v145 = vmul.f32 %v141, 0.70710677
    %v146 = verf.f32.pop %v145
    %v147 = vadd.f32 %v146, 1.0
    %v148 = vmul.f32 %v144, %v147
    %vm149 = vcmask 523264
    %v150 = vsel %vm149, %v148, 0.0
    %151 = vadd.xlane.f32.xlu0 %v150
    %v152 = vpop.xlane.xlu0 %151
    %v153 = vrcp.pop 64.0
    %v154 = vmul.f32 %v152, %v153
    %v155 = vsub.f32 %v148, %v154
    %v156 = vmul.f32 %v155, %v155
    %v157 = vsel %vm149, %v156, 0.0
    %158 = vadd.xlane.f32.xlu0 %v157
    %v159 = vpop.xlane.xlu0 %158
    %v160 = vmul.f32 %v159, %v153
    %v161 = vadd.f32 %v160, 1e-12
    %v162 = vrsqrt.pop %v161
    %v163 = vmul.f32 %v155, %v162
    %v164 = vld [vmem:[%s2 + $0x1] sm:$0x1]
    %v165 = vlaneseq
    %v166 = vshrl.u32 %v165, 7
    %v167 = vsub.s32 0, %v166
    %v168 = vrot.slane %v164, %v167
    %v169 = vmul.f32 %v163, %v168
    %v170 = vld [vmem:[%s2 + $0x2] sm:$0x1]
    %v171 = vlaneseq
    %v172 = vshrl.u32 %v171, 7
    %v173 = vsub.s32 0, %v172
    %v174 = vrot.slane %v170, %v173
    %v175 = vadd.f32 %v169, %v174
    %v176 = vld [vmem:[#allocation7] sm:$0xff]
    %v177 = vld [vmem:[#allocation7 + $0x8] sm:$0xff]
    %v178 = vld [vmem:[#allocation7 + $0x10] sm:$0xff]
    %v179 = vld [vmem:[#allocation7 + $0x18] sm:$0xff]
    %v180 = vld [vmem:[#allocation7 + $0x20] sm:$0xff]
    %v181 = vld [vmem:[#allocation7 + $0x28] sm:$0xff]
    %v182 = vld [vmem:[#allocation7 + $0x30] sm:$0xff]
    %v183 = vld [vmem:[#allocation7 + $0x38] sm:$0xff]
    %v184 = vld [vmem:[%s4] sm:$0x1]
    %v186 = vlaneseq
    %v187 = vshrl.u32 %v186, 7
    %v188 = vsub.s32 0, %v187
    %v189 = vrot.slane %v184, %v188
    %v192 = vsel %vm149, %v175, 0
    %194 = vmatprep.subr.mxu0 0.0
    %195 = vmatpush1.msra.mxu0 %v176
    %196 = vmatprep.subr.mxu0 0.0
    %197 = vmatpush1.msra.mxu0 %v177
    %198 = vmatprep.subr.mxu0 0.0
    %199 = vmatpush1.msra.mxu0 %v178
    %200 = vmatprep.subr.mxu0 0.0
    %201 = vmatpush1.msra.mxu0 %v179
    %202 = vmatprep.subr.mxu0 0.0
    %203 = vmatpush1.msra.mxu0 %v180
    %204 = vmatprep.subr.mxu0 0.0
    %205 = vmatpush1.msra.mxu0 %v181
    %206 = vmatprep.subr.mxu0 0.0
    %207 = vmatpush1.msra.mxu0 %v182
    %208 = vmatprep.subr.mxu0 0.0
    %209 = vmatpush1.msra.mxu0 %v183
    %210 = vmatprep.subr.mxu0 0.0
    %211 = vmatpush1.msra.mxu0 0.0
    %212 = vmatprep.subr.mxu0 0.0
    %213 = vmatpush1.msra.mxu0 0.0
    %214 = vmatprep.subr.mxu0 0.0
    %215 = vmatpush1.msra.mxu0 0.0
    %216 = vmatprep.subr.mxu0 0.0
    %217 = vmatpush1.msra.mxu0 0.0
    %218 = vmatprep.subr.mxu0 0.0
    %219 = vmatpush1.msra.mxu0 0.0
    %220 = vmatprep.subr.mxu0 0.0
    %221 = vmatpush1.msra.mxu0 0.0
    %222 = vmatprep.subr.mxu0 0.0
    %223 = vmatpush1.msra.mxu0 0.0
    %224 = vmatprep.subr.mxu0 0.0
    %225 = vmatpush1.msra.mxu0 0.0
    %226 = vmatprep.subr.mxu0 0.0
    %227 = vmatpush1.msra.mxu0 0.0
    %228 = vmatprep.subr.mxu0 0.0
    %229 = vmatpush1.msra.mxu0 0.0
    %230 = vmatprep.subr.mxu0 0.0
    %231 = vmatpush1.msra.mxu0 0.0
    %232 = vmatprep.subr.mxu0 0.0
    %233 = vmatpush1.msra.mxu0 0.0
    %234 = vmatprep.subr.mxu0 0.0
    %235 = vmatpush1.msra.mxu0 0.0
    %236 = vmatprep.subr.mxu0 0.0
    %237 = vmatpush1.msra.mxu0 0.0
    %238 = vmatprep.subr.mxu0 0.0
    %239 = vmatpush1.msra.mxu0 0.0
    %240 = vmatprep.subr.mxu0 0.0
    %241 = vmatpush1.msra.mxu0 0.0
    %242 = vmatprep.subr.mxu0 0.0
    %243 = vmatpush1.msra.mxu0 0.0
    %244 = vmatprep.subr.mxu0 0.0
    %245 = vmatpush1.msra.mxu0 0.0
    %246 = vmatprep.subr.mxu0 0.0
    %247 = vmatpush1.msra.mxu0 0.0
    %248 = vmatprep.subr.mxu0 0.0
    %249 = vmatpush1.msra.mxu0 0.0
    %250 = vmatprep.subr.mxu0 0.0
    %251 = vmatpush1.msra.mxu0 0.0
    %252 = vmatprep.subr.mxu0 0.0
    %253 = vmatpush1.msra.mxu0 0.0
    %254 = vmatprep.subr.mxu0 0.0
    %255 = vmatpush1.msra.mxu0 0.0
    %256 = vmatprep.subr.mxu0 0.0
    %257 = vmatpush1.msra.mxu0 0.0
    %258 = vmatprep.mubr.f32.mxu0 0.0
    %259 = vmatmul.mubr.f32.gmra.mrb[0].mxu0 %v192
    %v260 = vpop.f32.mrb[0].mxu0
    %v261 = vadd.f32 %v189, %v260
    %v262 = vpop.f32.mrb[0].mxu0
    %263 = vdwg.mxu0
    %264 = vst [vmem:[#allocation8] sm:$0xff] %v261
    // Predicated region
    $region34: #{tpu_custom_call.1} parent=1 // pred_check
      _
    $region35: #{tpu_custom_call.1} parent=1 // pred_check_branch
      %266 = sbr.rel (0) target = $region37
    $region36: #{tpu_custom_call.1} parent=1 // pred_region
      %s268 = ssub.s32 128, 128
      %269 = vsyncadd [#allocation4], %s268
      %s271 = sshll.u32 [#allocation8], 4
      %s272 = int_to_ptr.vmem [resolvable:$true] %s271
      %274 = dma.vmem_to_hbm [thread:$0]  %s272, 128, %s5, [#allocation4]
    $region37: #{tpu_custom_call.1} parent=1 // pred_fallthru
      _
    // Predicated region
    $region38: #{tpu_custom_call.1} parent=1 // pred_check
      _
    $region39: #{tpu_custom_call.1} parent=1 // pred_check_branch
      %276 = sbr.rel (0) target = $region41
    $region40: #{tpu_custom_call.1} parent=1 // pred_region
      %277 = dma.done [#allocation4], 128
    $region41: #{tpu_custom_call.1} parent=1 // pred_fallthru
      _
    %278 = vsyncpa [#allocation3], 1
    %279 = vsyncpa [#allocation6], 1
    %280 = vsyncpa [#allocation4], 1

</llo_original>
